<compile_context>
chip_gen: v7x
topology: tpu7x:2x2x1
jax: 0.10.0
libtpu: 0.0.40
codegen_flags: <defaults>
</compile_context>

<pallas_src>
import functools

import jax
import jax.numpy as jnp
from jax.experimental import pallas as pl
from jax.experimental.pallas import tpu as pltpu


def _pos_emb_kernel(pos_ref, inv_ref, out_ref):
    # pos_ref: (TILE_T, 1), inv_ref: (1, H), out_ref: (TILE_T, 2*H)
    half = inv_ref.shape[-1]
    sinusoid = pos_ref[...] * inv_ref[...]            # (TILE_T, H) broadcast (VPU)
    s = jnp.sin(sinusoid)                             # EUP
    c = jnp.cos(sinusoid)                             # EUP
    if half % 128 == 0:
        # Both halves start on a lane-tile boundary -> unmasked full-width vst.
        out_ref[:, :half] = s.astype(out_ref.dtype)
        out_ref[:, half:] = c.astype(out_ref.dtype)
    else:
        # Splitting at `half` would force masked partial-lane stores; do a
        # single full-block store instead (concat happens in vregs).
        out_ref[...] = jnp.concatenate([s, c], axis=-1).astype(out_ref.dtype)


def _round_up(x, m):
    return ((x + m - 1) // m) * m


def _select_tile(T, demb, tile_t):
    # VMEM budget (~12 MiB): 2x double-buffered output tile + f32 sin/cos temps.
    bytes_per_row = demb * 4 * 4
    vmem_rows = max(8, ((12 << 20) // max(bytes_per_row, 1)) // 8 * 8)
    tile = max(8, min(_round_up(tile_t, 8), vmem_rows))
    # Balance blocks for ragged T (avoid a nearly-empty last block).
    nblk = pl.cdiv(T, tile)
    tile = min(tile, _round_up(pl.cdiv(T, nblk), 8))
    return tile


@functools.partial(jax.jit, static_argnames=("bsz", "tile_t", "out_dtype"))
def positional_embedding(pos_seq, inv_freq, bsz=None, tile_t=1024,
                         out_dtype=jnp.float32):
    """pos_seq: (T,) float; inv_freq: (demb//2,) float. Returns (bsz or 1, T, demb)."""
    T = pos_seq.shape[0]
    half = inv_freq.shape[0]
    demb = 2 * half

    tile = _select_tile(T, demb, tile_t)
    grid_t = pl.cdiv(T, tile)

    pos2d = pos_seq.astype(jnp.float32).reshape(T, 1)
    inv2d = inv_freq.astype(jnp.float32).reshape(1, half)

    pos_emb = pl.pallas_call(
        _pos_emb_kernel,
        out_shape=jax.ShapeDtypeStruct((T, demb), out_dtype),
        grid=(grid_t,),
        in_specs=[
            pl.BlockSpec((tile, 1), lambda i: (i, 0)),     # stream pos rows
            pl.BlockSpec((1, half), lambda i: (0, 0)),     # resident inv_freq
        ],
        out_specs=pl.BlockSpec((tile, demb), lambda i: (i, 0)),
        compiler_params=pltpu.CompilerParams(
            dimension_semantics=("parallel",),
        ),
    )(pos2d, inv2d)

    pos_emb = pos_emb[None, :, :]                          # (1, T, demb)
    if bsz is not None:
        # Matches torch .expand(); prefer bsz=None in production to avoid
        # materializing a (bsz, T, demb) HBM array under jit.
        pos_emb = jnp.broadcast_to(pos_emb, (bsz, T, demb))
    return pos_emb


def make_inv_freq(demb):
    # Identical to the PyTorch __init__ buffer:
    # inv_freq = 1 / 10000 ** (arange(0, demb, 2) / demb)
    return 1.0 / (10000.0 ** (jnp.arange(0.0, demb, 2.0) / demb))


def _reference(pos_seq, inv_freq, bsz=None):
    sinusoid = pos_seq[:, None].astype(jnp.float32) * inv_freq[None, :].astype(jnp.float32)
    pe = jnp.concatenate([jnp.sin(sinusoid), jnp.cos(sinusoid)], axis=1)
    pe = pe[None, :, :]
    if bsz is not None:
        pe = jnp.broadcast_to(pe, (bsz,) + pe.shape[1:])
    return pe


if __name__ == "__main__":
    key = jax.random.PRNGKey(0)

    # --- small test, matching the module's implied shapes ---
    demb = 32
    T = 8
    bsz = 2
    inv_freq = make_inv_freq(demb)
    pos_seq = jnp.arange(T, dtype=jnp.float32) + 0.0 * jax.random.normal(key, (T,))

    out = positional_embedding(pos_seq, inv_freq, bsz=bsz)
    jax.block_until_ready(out)
    ref = _reference(pos_seq, inv_freq, bsz=bsz)
    assert out.shape == (bsz, T, demb)
    assert jnp.allclose(out, ref, atol=1e-6), "mismatch vs reference (small)"

    # --- ragged T: exercises the uneven-last-block path (no pad/slice) ---
    T2 = 1030
    pos_seq2 = jnp.arange(T2, dtype=jnp.float32)
    out2 = positional_embedding(pos_seq2, inv_freq)          # bsz=None path
    jax.block_until_ready(out2)
    ref2 = _reference(pos_seq2, inv_freq)
    assert out2.shape == (1, T2, demb)
    assert jnp.allclose(out2, ref2, atol=1e-5), "mismatch vs reference (ragged)"

    # --- lane-aligned half (demb//2 % 128 == 0): split-store path ---
    demb3 = 256
    T3 = 72
    inv_freq3 = make_inv_freq(demb3)
    pos_seq3 = jnp.arange(T3, dtype=jnp.float32)
    out3 = positional_embedding(pos_seq3, inv_freq3)
    jax.block_until_ready(out3)
    ref3 = _reference(pos_seq3, inv_freq3)
    assert out3.shape == (1, T3, demb3)
    assert jnp.allclose(out3, ref3, atol=1e-5), "mismatch vs reference (aligned)"

    # --- reduced-precision output path (gate behind out_dtype flag) ---
    out_bf16 = positional_embedding(pos_seq2, inv_freq, out_dtype=jnp.bfloat16)
    jax.block_until_ready(out_bf16)
    assert out_bf16.dtype == jnp.bfloat16
    assert jnp.allclose(out_bf16.astype(jnp.float32), ref2, atol=2e-2), \
        "mismatch vs reference (bf16)"

    print("KERNEL_OK")
</pallas_src>

<mosaic_0001>
module attributes {stable_mosaic.version = 11 : i64} {
  func.func @_pos_emb_kernel(%arg0: i32, %arg1: memref<8x1xf32, #tpu.memory_space<vmem>>, %arg2: memref<1x16xf32, #tpu.memory_space<vmem>>, %arg3: memref<8x32xf32, #tpu.memory_space<vmem>>) attributes {dimension_semantics = [#tpu.dimension_semantics<parallel>], iteration_bounds = array<i64: 1>, scalar_prefetch = 0 : i64, scratch_operands = 0 : i64, tpu.core_type = #tpu.core_type<tc>, window_params = [{transform_indices = @transform_0, window_bounds = array<i64: 8, 1>}, {pipeline_mode = #tpu.pipeline_mode<synchronous>, transform_indices = @transform_1, window_bounds = array<i64: 1, 16>}, {transform_indices = @transform_2, window_bounds = array<i64: 8, 32>}]} {
    %c0 = arith.constant 0 : index
    %c0_0 = arith.constant 0 : index
    %0 = vector.load %arg1[%c0, %c0_0] : memref<8x1xf32, #tpu.memory_space<vmem>>, vector<8x1xf32>
    %c0_1 = arith.constant 0 : index
    %c0_2 = arith.constant 0 : index
    %1 = vector.load %arg2[%c0_1, %c0_2] : memref<1x16xf32, #tpu.memory_space<vmem>>, vector<1x16xf32>
    %2 = vector.broadcast %0 : vector<8x1xf32> to vector<8x16xf32>
    %3 = vector.broadcast %1 : vector<1x16xf32> to vector<8x16xf32>
    %4 = arith.mulf %2, %3 : vector<8x16xf32>
    %5 = math.sin %4 : vector<8x16xf32>
    %6 = math.cos %4 : vector<8x16xf32>
    %7 = tpu.concatenate %5, %6 in 1 : vector<8x16xf32>, vector<8x16xf32> -> vector<8x32xf32>
    %c0_3 = arith.constant 0 : index
    %c0_4 = arith.constant 0 : index
    %8 = vector.load %arg3[%c0_3, %c0_4] : memref<8x32xf32, #tpu.memory_space<vmem>>, vector<8x32xf32>
    tpu.vector_store %arg3[%c0_3, %c0_4], %7 {strides = array<i32>} : memref<8x32xf32, #tpu.memory_space<vmem>>, vector<8x32xf32>,
    return
  }
  func.func @transform_0(%arg0: i32) -> (i32, i32) {
    %c0_i32 = arith.constant 0 : i32
    %c0_i32_0 = arith.constant 0 : i32
    return %arg0, %c0_i32 : i32, i32
  }
  func.func @transform_1(%arg0: i32) -> (i32, i32) {
    %c0_i32 = arith.constant 0 : i32
    %c0_i32_0 = arith.constant 0 : i32
    %c0_i32_1 = arith.constant 0 : i32
    return %c0_i32, %c0_i32_0 : i32, i32
  }
  func.func @transform_2(%arg0: i32) -> (i32, i32) {
    %c0_i32 = arith.constant 0 : i32
    %c0_i32_0 = arith.constant 0 : i32
    return %arg0, %c0_i32 : i32, i32
  }
}

</mosaic_0001>

<llo_original>
// kernel: positional_embedding.1
$region0: #{positional_embedding.1}
  #allocation0 [shape = 'u32[]', space=smem, size = 0x4, offset = 0x4, fixed_abs, tag = 'smem constant byte address 0x4 - core index']
  #allocation1 [shape = 'u32[144,128]{1,0:T(1,128)}', space=vmem, size = 0x12000, scoped, tag = 'internal scratch']
  %s0 = inlined_call_operand.vmem [shape: f32[8,1], index: 0, kind: input, shape index: {}]
  %s1 = inlined_call_operand.vmem [shape: f32[1,16], index: 1, kind: input, shape index: {}]
  %s2 = inlined_call_operand.vmem [shape: f32[8,32], index: 2, kind: output, shape index: {}]
  %s3 = sld [smem:[#allocation0]]
  $region18: #{positional_embedding.1} parent=0
    _
  %s5 = ssub.s32 1, %s3
  %s6 = scalar_select 0, %s5, %s3
  // Predicated region
  $region2: #{positional_embedding.1} parent=0 // pred_check
    _
  $region3: #{positional_embedding.1} parent=0 // pred_check_branch
    %8 = sbr.rel (0) target = $region5
  $region4: #{positional_embedding.1} parent=0 // pred_region
    _
  $region5: #{positional_embedding.1} parent=0 // pred_fallthru
    _
  // Predicated region
  $region6: #{positional_embedding.1} parent=0 // pred_check
    _
  $region7: #{positional_embedding.1} parent=0 // pred_check_branch
    %10 = sbr.rel (0) target = $region9
  $region8: #{positional_embedding.1} parent=0 // pred_region
    _
  $region9: #{positional_embedding.1} parent=0 // pred_fallthru
    _
  %v11 = vld [vmem:[%s0] sm:$0xff]
  %v12 = vld [vmem:[%s1] sm:$0x1]
  %14 = vset.pattern.permute.xlu0 0
  %15 = vperm.xlu0 %14, %v11
  %v16 = vpop.permute.xlu0 %15
  %v19 = vlaneseq
  %v20 = vshrl.u32 %v19, 7
  %v21 = vsub.s32 0, %v20
  %v22 = vrot.slane %v12, %v21
  %v24 = vmul.f32 %v16, %v22
  %v25 = vand.u32 2147483647, %v24
  %vm26 = vcmp.le.f32.partialorder %v25, 0.7853982
  %vm27 = vcmp.lt.s32.totalorder %v24, 0
  %v28 = vand.u32 %v24, 2139095040
  %v29 = vshrl.u32 %v28, 23
  %v30 = vsub.s32 %v29, 127
  %v31 = vand.u32 2147483647, %v24
  %v32 = vand.u32 %v31, 8388607
  %v33 = vor.u32 %v32, 8388608
  %v34 = vsub.s32 0, %v33
  %v35 = vadd.s32 %v30, 1
  %vm36 = vcmp.gt.s32.totalorder %v35, 0
  %v37 = vsel %vm36, %v35, 0
  %v38 = vshrl.u32 %v37, 5
  %v39 = vand.u32 %v37, 31
  %v40 = vsub.s32 32, %v39
  %v41 = vshrl.u32 683565275, %v40
  %v42 = vshll.u32 683565275, %v39
  %v43 = vshrl.u32 2475754826, %v40
  %v44 = vor.u32 %v42, %v43
  %v45 = vshll.u32 2475754826, %v39
  %v46 = vshrl.u32 2131351028, %v40
  %v47 = vor.u32 %v45, %v46
  %v48 = vshll.u32 2131351028, %v39
  %v49 = vshrl.u32 2102212464, %v40
  %v50 = vor.u32 %v48, %v49
  %v51 = vshll.u32 2102212464, %v39
  %v52 = vshrl.u32 920167782, %v40
  %v53 = vor.u32 %v51, %v52
  %v54 = vshll.u32 920167782, %v39
  %v55 = vshrl.u32 1326507024, %v40
  %v56 = vor.u32 %v54, %v55
  %vm57 = vcmp.lt.s32.totalorder %v38, 1
  %vm58 = vcmp.lt.s32.totalorder %v38, 2
  %vm59 = vcmp.lt.s32.totalorder %v38, 3
  %vm60 = vcmp.lt.s32.totalorder %v38, 4
  %v61 = vsel %vm57, %v41, %v44
  %v62 = vsel %vm60, %v50, 2102212464
  %v63 = vsel %vm59, %v47, %v62
  %v64 = vsel %vm58, %v61, %v63
  %v65 = vsel %vm57, %v44, %v47
  %v66 = vsel %vm60, %v53, 920167782
  %v67 = vsel %vm59, %v50, %v66
  %v68 = vsel %vm58, %v65, %v67
  %v69 = vsel %vm57, %v47, %v50
  %v70 = vsel %vm60, %v56, 1326507024
  %v71 = vsel %vm59, %v53, %v70
  %v72 = vsel %vm58, %v69, %v71
  %v73 = vshll.u32 %v33, 8
  %v74 = vmul.u32.u64.compose %v73, %v72
  %v75 = vextract.low.u32 %v74
  %v76 = vextract.high.u32 %v74
  %v77 = vmul.u32.u64.compose %v73, %v68
  %v78 = vextract.low.u32 %v77
  %v79 = vextract.high.u32 %v77
  %v80 = vmul.u32 %v73, %v64
  %v81 = vadd.s32 %v76, %v78
  %vm82 = vc.u32 %v76, %v78
  %v83 = vadd.s32 %v79, 1
  %v84 = vsel %vm82, %v83, %v79
  %v85 = vadd.s32 %v80, %v84
  %v86 = vadd.s32 %v85, 536870912
  %v87 = vshrl.u32 %v86, 30
  %v88 = vshll.u32 %v87, 30
  %v89 = vsub.s32 %v85, %v88
  %vm90 = vcmp.lt.s32.totalorder %v89, 0
  %v91 = vsub.s32 0, %v89
  %v92 = vsel %vm90, %v91, %v89
  %v93 = vclz %v92
  %v94 = vsub.s32 %v93, 2
  %vm95 = vcmp.gt.s32.totalorder 0, %v94
  %v96 = vsel %vm95, 0, %v94
  %v97 = vsub.s32 32, %v96
  %v98 = vshll.u32 %v89, %v96
  %v99 = vshrl.u32 %v81, %v97
  %v100 = vor.u32 %v98, %v99
  %v101 = vsub.s32 4294967266, %v96
  %v102 = vadd.s32 %v101, 127
  %v103 = vshll.u32 %v102, 23
  %v104 = vor.u32 4788187, %v103
  %v105 = vand.u32 2147483647, %v104
  %v107 = vcvt.s32.f32 %v100
  %v108 = vmul.f32 %v107, %v105
  %v109 = vxor.u32 %v108, 2147483648
  %v110 = vsel %vm27, %v109, %v108
  %v111 = vsub.s32 4, %v87
  %v112 = vsel %vm27, %v111, %v87
  %v113 = vsel %vm26, %v24, %v110
  %v114 = vsel %vm26, 0, %v112
  %v115 = vcosq.f32.pop %v113
  %v116 = vsinq.f32.pop %v113
  %vm117 = vweird.f32 %v24
  %v118 = vadd.s32 %v114, 3
  %v119 = vand.u32 %v118, 3
  %vm120 = vcmp.lt.s32.totalorder %v119, 2
  %vm121 = vcmp.eq.s32.totalorder %v119, 0
  %v122 = vxor.u32 %v116, 2147483648
  %v123 = vsel %vm121, %v115, %v122
  %vm124 = vcmp.eq.s32.totalorder %v119, 2
  %v125 = vxor.u32 %v115, 2147483648
  %v126 = vsel %vm124, %v125, %v116
  %v127 = vsel %vm120, %v123, %v126
  %v128 = vsel %vm117, nan, %v127
  %v129 = vand.u32 2147483647, %v24
  %vm130 = vcmp.le.f32.partialorder %v129, 0.7853982
  %vm131 = vcmp.lt.s32.totalorder %v24, 0
  %v132 = vand.u32 %v24, 2139095040
  %v133 = vshrl.u32 %v132, 23
  %v134 = vsub.s32 %v133, 127
  %v135 = vand.u32 2147483647, %v24
  %v136 = vand.u32 %v135, 8388607
  %v137 = vor.u32 %v136, 8388608
  %v138 = vsub.s32 0, %v137
  %v139 = vadd.s32 %v134, 1
  %vm140 = vcmp.gt.s32.totalorder %v139, 0
  %v141 = vsel %vm140, %v139, 0
  %v142 = vshrl.u32 %v141, 5
  %v143 = vand.u32 %v141, 31
  %v144 = vsub.s32 32, %v143
  %v145 = vshrl.u32 683565275, %v144
  %v146 = vshll.u32 683565275, %v143
  %v147 = vshrl.u32 2475754826, %v144
  %v148 = vor.u32 %v146, %v147
  %v149 = vshll.u32 2475754826, %v143
  %v150 = vshrl.u32 2131351028, %v144
  %v151 = vor.u32 %v149, %v150
  %v152 = vshll.u32 2131351028, %v143
  %v153 = vshrl.u32 2102212464, %v144
  %v154 = vor.u32 %v152, %v153
  %v155 = vshll.u32 2102212464, %v143
  %v156 = vshrl.u32 920167782, %v144
  %v157 = vor.u32 %v155, %v156
  %v158 = vshll.u32 920167782, %v143
  %v159 = vshrl.u32 1326507024, %v144
  %v160 = vor.u32 %v158, %v159
  %vm161 = vcmp.lt.s32.totalorder %v142, 1
  %vm162 = vcmp.lt.s32.totalorder %v142, 2
  %vm163 = vcmp.lt.s32.totalorder %v142, 3
  %vm164 = vcmp.lt.s32.totalorder %v142, 4
  %v165 = vsel %vm161, %v145, %v148
  %v166 = vsel %vm164, %v154, 2102212464
  %v167 = vsel %vm163, %v151, %v166
  %v168 = vsel %vm162, %v165, %v167
  %v169 = vsel %vm161, %v148, %v151
  %v170 = vsel %vm164, %v157, 920167782
  %v171 = vsel %vm163, %v154, %v170
  %v172 = vsel %vm162, %v169, %v171
  %v173 = vsel %vm161, %v151, %v154
  %v174 = vsel %vm164, %v160, 1326507024
  %v175 = vsel %vm163, %v157, %v174
  %v176 = vsel %vm162, %v173, %v175
  %v177 = vshll.u32 %v137, 8
  %v178 = vmul.u32.u64.compose %v177, %v176
  %v179 = vextract.low.u32 %v178
  %v180 = vextract.high.u32 %v178
  %v181 = vmul.u32.u64.compose %v177, %v172
  %v182 = vextract.low.u32 %v181
  %v183 = vextract.high.u32 %v181
  %v184 = vmul.u32 %v177, %v168
  %v185 = vadd.s32 %v180, %v182
  %vm186 = vc.u32 %v180, %v182
  %v187 = vadd.s32 %v183, 1
  %v188 = vsel %vm186, %v187, %v183
  %v189 = vadd.s32 %v184, %v188
  %v190 = vadd.s32 %v189, 536870912
  %v191 = vshrl.u32 %v190, 30
  %v192 = vshll.u32 %v191, 30
  %v193 = vsub.s32 %v189, %v192
  %vm194 = vcmp.lt.s32.totalorder %v193, 0
  %v195 = vsub.s32 0, %v193
  %v196 = vsel %vm194, %v195, %v193
  %v197 = vclz %v196
  %v198 = vsub.s32 %v197, 2
  %vm199 = vcmp.gt.s32.totalorder 0, %v198
  %v200 = vsel %vm199, 0, %v198
  %v201 = vsub.s32 32, %v200
  %v202 = vshll.u32 %v193, %v200
  %v203 = vshrl.u32 %v185, %v201
  %v204 = vor.u32 %v202, %v203
  %v205 = vsub.s32 4294967266, %v200
  %v206 = vadd.s32 %v205, 127
  %v207 = vshll.u32 %v206, 23
  %v208 = vor.u32 4788187, %v207
  %v209 = vand.u32 2147483647, %v208
  %v211 = vcvt.s32.f32 %v204
  %v212 = vmul.f32 %v211, %v209
  %v213 = vxor.u32 %v212, 2147483648
  %v214 = vsel %vm131, %v213, %v212
  %v215 = vsub.s32 4, %v191
  %v216 = vsel %vm131, %v215, %v191
  %v217 = vsel %vm130, %v24, %v214
  %v218 = vsel %vm130, 0, %v216
  %v219 = vcosq.f32.pop %v217
  %v220 = vsinq.f32.pop %v217
  %vm221 = vweird.f32 %v24
  %v222 = vand.u32 %v218, 3
  %vm223 = vcmp.lt.s32.totalorder %v222, 2
  %vm224 = vcmp.eq.s32.totalorder %v222, 0
  %v225 = vxor.u32 %v220, 2147483648
  %v226 = vsel %vm224, %v219, %v225
  %vm227 = vcmp.eq.s32.totalorder %v222, 2
  %v228 = vxor.u32 %v219, 2147483648
  %v229 = vsel %vm227, %v228, %v220
  %v230 = vsel %vm223, %v226, %v229
  %v231 = vsel %vm221, nan, %v230
  %233 = vrot.lane.b32.xlu0 %v231, 16
  %v234 = vpop.permute.xlu0 %233
  %vm236 = vcmask 130048
  %v237 = vsel %vm236, %v128, %v234
  %vm238 = vcmask 261120
  %239 = vst.msk [vmem:[%s2] sm:$0xff] %vm238, %v237
  // Predicated region
  $region10: #{positional_embedding.1} parent=0 // pred_check
    _
  $region11: #{positional_embedding.1} parent=0 // pred_check_branch
    %241 = sbr.rel (0) target = $region13
  $region12: #{positional_embedding.1} parent=0 // pred_region
    _
  $region13: #{positional_embedding.1} parent=0 // pred_fallthru
    _
  // Predicated region
  $region14: #{positional_embedding.1} parent=0 // pred_check
    _
  $region15: #{positional_embedding.1} parent=0 // pred_check_branch
    %243 = sbr.rel (0) target = $region17
  $region16: #{positional_embedding.1} parent=0 // pred_region
    _
  $region17: #{positional_embedding.1} parent=0 // pred_fallthru
    _

</llo_original>
